<compile_context>
chip_gen: v7x
topology: tpu7x:2x2x1
jax: 0.10.0
libtpu: 0.0.40
codegen_flags: <defaults>
</compile_context>

<pallas_src>
import jax
import jax.numpy as jnp
from jax.experimental import pallas as pl
from jax.experimental.pallas import tpu as pltpu


def msp_kernel(logits_ref, out_ref):
    # logits_ref: (tm, C) tile in VMEM; out_ref: (1, 1, tm) lane-dense f32 row.
    x = logits_ref[...].astype(jnp.float32)            # f32 math on all gens
    m = jnp.max(x, axis=1, keepdims=True)               # row max (XLU)
    denom = jnp.sum(jnp.exp(x - m), axis=1)              # EUP exp + XLU sum -> (tm,)
    # max softmax prob == exp(x_max - m) / denom == 1 / denom (exactly)
    out_ref[...] = (1.0 / denom).reshape(out_ref.shape)


def _round_up(x, m):
    return -(-x // m) * m


def _pick_tm(n_rows, n_cols, itemsize):
    """Row-tile size: ~3 MiB of logits per pipeline buffer, >= 2 grid steps."""
    per_buffer_budget = 3 * 1024 * 1024          # bytes of logits per tile
    temp_factor = 1 if itemsize >= 4 else 3      # cover f32 temps for narrow dtypes
    row_bytes = max(n_cols * itemsize * temp_factor, 1)
    tm = (per_buffer_budget // row_bytes) // 8 * 8
    tm = max(tm, 8)
    n_rounded = _round_up(n_rows, 8)
    tm = min(tm, n_rounded)
    if n_rounded >= 16:
        # Keep at least 2 tiles so the "parallel" grid axis can feed both of
        # v7x's TensorCores (and give the pipeline something to overlap).
        tm = min(tm, _round_up((n_rows + 1) // 2, 8))
    return int(max(tm, 8))


def msp_forward(logits, *, tm=None):
    """Per-row max-softmax-probability scores via a tiled Pallas kernel."""
    N, C = logits.shape
    itemsize = jnp.dtype(logits.dtype).itemsize
    if tm is None:
        tm = _pick_tm(N, C, itemsize)
    n_tiles = pl.cdiv(N, tm)
    # TODO(synk): for class counts so large that even an (8, C) tile (plus f32
    # temporaries) exceeds scoped VMEM, add a second "arbitrary" grid axis over
    # C with an online max/sum (flash-softmax style) accumulator.

    out = pl.pallas_call(
        msp_kernel,
        out_shape=jax.ShapeDtypeStruct((n_tiles, 1, tm), jnp.float32),
        grid_spec=pl.GridSpec(
            grid=(n_tiles,),
            in_specs=[pl.BlockSpec((tm, C), lambda i: (i, 0))],
            out_specs=pl.BlockSpec((1, 1, tm), lambda i: (i, 0, 0)),
        ),
        compiler_params=pltpu.CompilerParams(
            dimension_semantics=("parallel",),   # shards tiles across v7x's 2 TCs
        ),
        cost_estimate=pl.CostEstimate(
            flops=3 * N * C,
            transcendentals=N * C,
            bytes_accessed=N * C * itemsize + 4 * n_tiles * tm,
        ),
    )(logits)
    # Rows >= N in the last (ragged) tile hold garbage and are sliced off here.
    return out.reshape(n_tiles * tm)[:N]   # (N,) — matches torch's .max(dim=1)[0]


if __name__ == "__main__":
    key = jax.random.PRNGKey(0)
    N, C = 16, 32  # small: batch=16, num_classes=32
    logits = jax.random.normal(key, (N, C), dtype=jnp.float32)

    scores = msp_forward(logits)
    scores = jax.block_until_ready(scores)

    ref = jnp.max(jax.nn.softmax(logits, axis=1), axis=1)
    assert scores.shape == (N,)
    assert jnp.allclose(scores, ref, atol=1e-5, rtol=1e-5), "mismatch vs reference"

    # Ragged-tail path (N not a multiple of tm): no wrapper padding, garbage
    # rows are confined to the sliced-off tail.
    N2 = 13
    logits2 = jax.random.normal(jax.random.PRNGKey(1), (N2, C), dtype=jnp.float32)
    scores2 = jax.block_until_ready(msp_forward(logits2))
    ref2 = jnp.max(jax.nn.softmax(logits2, axis=1), axis=1)
    assert scores2.shape == (N2,)
    assert jnp.allclose(scores2, ref2, atol=1e-5, rtol=1e-5), "ragged-tail mismatch"

    print("KERNEL_OK")
</pallas_src>

<mosaic_0001>
module attributes {stable_mosaic.version = 11 : i64} {
  func.func @msp_kernel(%arg0: i32, %arg1: memref<8x32xf32, #tpu.memory_space<vmem>>, %arg2: memref<1x1x8xf32, #tpu.memory_space<vmem>>) attributes {dimension_semantics = [#tpu.dimension_semantics<parallel>], iteration_bounds = array<i64: 2>, scalar_prefetch = 0 : i64, scratch_operands = 0 : i64, tpu.core_type = #tpu.core_type<tc>, window_params = [{transform_indices = @transform_0, window_bounds = array<i64: 8, 32>}, {transform_indices = @transform_1, window_bounds = array<i64: 1, 1, 8>}]} {
    %c0 = arith.constant 0 : index
    %c0_0 = arith.constant 0 : index
    %0 = vector.load %arg1[%c0, %c0_0] : memref<8x32xf32, #tpu.memory_space<vmem>>, vector<8x32xf32>
    %cst = arith.constant dense<0xFF800000> : vector<8xf32>
    %1 = vector.multi_reduction <maximumf>, %0, %cst [1] : vector<8x32xf32> to vector<8xf32>
    %2 = vector.shape_cast %1 : vector<8xf32> to vector<8x1xf32>
    %3 = vector.broadcast %2 : vector<8x1xf32> to vector<8x32xf32>
    %4 = arith.subf %0, %3 : vector<8x32xf32>
    %5 = math.exp %4 : vector<8x32xf32>
    %cst_1 = arith.constant dense<0.000000e+00> : vector<8xf32>
    %6 = vector.multi_reduction <add>, %5, %cst_1 [1] : vector<8x32xf32> to vector<8xf32>
    %cst_2 = arith.constant 1.000000e+00 : f32
    %7 = vector.broadcast %cst_2 : f32 to vector<8xf32>
    %8 = arith.divf %7, %6 : vector<8xf32>
    %9 = vector.shape_cast %8 : vector<8xf32> to vector<1x1x8xf32>
    %c0_3 = arith.constant 0 : index
    %c0_4 = arith.constant 0 : index
    %c0_5 = arith.constant 0 : index
    %10 = vector.load %arg2[%c0_3, %c0_4, %c0_5] : memref<1x1x8xf32, #tpu.memory_space<vmem>>, vector<1x1x8xf32>
    tpu.vector_store %arg2[%c0_3, %c0_4, %c0_5], %9 {strides = array<i32>} : memref<1x1x8xf32, #tpu.memory_space<vmem>>, vector<1x1x8xf32>,
    return
  }
  func.func @transform_0(%arg0: i32) -> (i32, i32) {
    %c0_i32 = arith.constant 0 : i32
    %c0_i32_0 = arith.constant 0 : i32
    return %arg0, %c0_i32 : i32, i32
  }
  func.func @transform_1(%arg0: i32) -> (i32, i32, i32) {
    %c0_i32 = arith.constant 0 : i32
    %c0_i32_0 = arith.constant 0 : i32
    %c0_i32_1 = arith.constant 0 : i32
    return %arg0, %c0_i32, %c0_i32_0 : i32, i32, i32
  }
}

</mosaic_0001>

<llo_original>
// kernel: tpu_custom_call.1
$region0: #{tpu_custom_call.1}
  #allocation0 [shape = 'u32[]', space=smem, size = 0x4, offset = 0x4, fixed_abs, tag = 'smem constant byte address 0x4 - core index']
  #allocation1 [shape = 'u32[144,128]{1,0:T(1,128)}', space=vmem, size = 0x12000, scoped, tag = 'internal scratch']
  %s0 = inlined_call_operand.hbm [shape: f32[16,32], index: 0, kind: input, shape index: {}]
  %s1 = inlined_call_operand.hbm [shape: f32[2,1,8], index: 1, kind: output, shape index: {}]
  %s2 = sld [smem:[#allocation0]]
  $region41: #{tpu_custom_call.1} parent=0
    _
  %s4 = ssub.s32 1, %s2
  %s5 = scalar_select 0, %s4, %s2
  $region1: #{tpu_custom_call.1} parent=0
    #allocation2 [shape = 'u8[8192]{0}', space=vmem, size = 0x2000, scoped, tag = 'input window, operand 0']
    #allocation3 [shape = 's32[2]{0}', space=sflag, size = 0x8, scoped, tag = 'scoped memory for tpu_custom_call.1']
    #allocation4 [shape = 's32[2]{0}', space=sflag, size = 0x8, scoped, tag = 'scoped memory for tpu_custom_call.1']
    #allocation5 [shape = 'u8[1024]{0}', space=vmem, size = 0x400, scoped, tag = 'output window, operand 0']
    %6 = vsyncpa [#allocation3], 0
    %s7 = scalar_lea.sflag [#allocation3], 1
    %8 = vsyncpa %s7, 0
    %9 = vsyncpa [#allocation4], 0
    %s10 = scalar_lea.sflag [#allocation4], 1
    %11 = vsyncpa %s10, 0
    loop: start=0, step=1, limit=4
    $region2: #{tpu_custom_call.1} parent=1 // loop_pre_header
      _
    $region3: #{tpu_custom_call.1} parent=1 // loop_header
      %s13 = sphi 0, %s17
      %p14 = scmp.ge.s32.totalorder %s13, 4
      %s23 = sphi 0, %s25
      %s26 = sphi 0, %s23
      %s27 = sphi 0, %s26
      %s43 = sphi 0, %s27
      %s49 = sphi 0, %s51
      %s52 = sphi 0, %s49
      %s53 = sphi 0, %s52
      %s69 = sphi 0, %s53
    $region4: #{tpu_custom_call.1} parent=1 // loop_header_branch
      %16 = sbr.rel (%p14) target = $region8
    $region5: #{tpu_custom_call.1} parent=1 // loop_body
      %s18 = ssub.s32 %s13, 1
      %s19 = ssub.s32 %s13, 2
      %s20 = sadd.s32 %s13, 1
      %s21 = ssub.s32 %s13, %s20
      %p22 = scmp.eq.s32.totalorder %s21, 0
      %s24 = sadd.s32 %s23, 1
      %s25 = scalar_select %p22, %s23, %s24
      %p28 = pneg %p22
      %p29 = scmp.eq.s32.totalorder %s13, 1
      %p30 = por %p28, %p29
      %p31 = scmp.ne.s32.totalorder %s23, %s26
      %p32 = scmp.eq.s32.totalorder %s13, 0
      %p33 = por %p31, %p32
      %p34 = scmp.ne.s32.totalorder %s23, %s26
      %p35 = scmp.eq.s32.totalorder %s18, 1
      %p36 = por %p34, %p35
      %p37 = scmp.ne.s32.totalorder %s26, %s27
      %p38 = scmp.eq.s32.totalorder %s18, 0
      %p39 = por %p37, %p38
      %p40 = scmp.ne.s32.totalorder %s26, %s27
      %p41 = scmp.eq.s32.totalorder %s19, 1
      %p42 = por %p40, %p41
      %p44 = scmp.ne.s32.totalorder %s27, %s43
      %p45 = scmp.eq.s32.totalorder %s19, 0
      %p46 = por %p44, %p45
      %s47 = ssub.s32 %s13, %s20
      %p48 = scmp.eq.s32.totalorder %s47, 0
      %s50 = sadd.s32 %s49, 1
      %s51 = scalar_select %p48, %s49, %s50
      %p54 = pneg %p48
      %p55 = scmp.eq.s32.totalorder %s13, 1
      %p56 = por %p54, %p55
      %p57 = scmp.ne.s32.totalorder %s49, %s52
      %p58 = scmp.eq.s32.totalorder %s13, 0
      %p59 = por %p57, %p58
      %p60 = scmp.ne.s32.totalorder %s49, %s52
      %p61 = scmp.eq.s32.totalorder %s18, 1
      %p62 = por %p60, %p61
      %p63 = scmp.ne.s32.totalorder %s52, %s53
      %p64 = scmp.eq.s32.totalorder %s18, 0
      %p65 = por %p63, %p64
      %p66 = scmp.ne.s32.totalorder %s52, %s53
      %p67 = scmp.eq.s32.totalorder %s19, 1
      %p68 = por %p66, %p67
      %p70 = scmp.ne.s32.totalorder %s53, %s69
      %p71 = scmp.eq.s32.totalorder %s19, 0
      %p72 = por %p70, %p71
      %p73 = scmp.le.s32.totalorder 1, %s13
      %p74 = scmp.lt.s32.totalorder %s13, 3
      %p75 = pnand %p73, %p74
      %p76 = pneg %p75
      // Predicated region
      $region9: #{tpu_custom_call.1} parent=5 // pred_check
        _
      $region10: #{tpu_custom_call.1} parent=5 // pred_check_branch
        %78 = sbr.rel (%p75) target = $region12
      $region11: #{tpu_custom_call.1} parent=5 // pred_region
        %s79 = ssub.s32 %s13, 1
      $region12: #{tpu_custom_call.1} parent=5 // pred_fallthru
        _
      %p80 = scmp.lt.s32.totalorder %s13, 2
      // Predicated region
      $region13: #{tpu_custom_call.1} parent=5 // pred_check
        %p81 = pneg %p80
      $region14: #{tpu_custom_call.1} parent=5 // pred_check_branch
        %83 = sbr.rel (%p81) target = $region16
      $region15: #{tpu_custom_call.1} parent=5 // pred_region
        // Predicated region
        $region17: #{tpu_custom_call.1} parent=15 // pred_check
          %p84 = pneg %p33
        $region18: #{tpu_custom_call.1} parent=15 // pred_check_branch
          %86 = sbr.rel (%p84) target = $region20
        $region19: #{tpu_custom_call.1} parent=15 // pred_region
          %s87 = sand.u32 %s23, 1
          %s88 = scalar_lea.sflag [#allocation3], %s87
          %s89 = sand.u32 %s23, 1
          %s90 = smul.addr %s89, 8
          %s91 = scalar_lea.vmem [#allocation2], %s90
          %s93 = ssub.s32 128, 128
          %94 = vsyncadd %s88, %s93
          %s95 = smul.addr %s13, 128
          %s96 = scalar_lea.hbm %s0, %s95
          %s98 = sshll.u32 %s91, 4
          %s99 = int_to_ptr.vmem [resolvable:$true] %s98
          %101 = dma.hbm_to_vmem [thread:$0]  %s96, 128, %s99, %s88
        $region20: #{tpu_custom_call.1} parent=15 // pred_fallthru
          _
      $region16: #{tpu_custom_call.1} parent=5 // pred_fallthru
        _
      %p102 = scmp.le.s32.totalorder 1, %s13
      %p103 = scmp.lt.s32.totalorder %s13, 3
      %p104 = pnand %p102, %p103
      %p105 = pneg %p104
      // Predicated region
      $region21: #{tpu_custom_call.1} parent=5 // pred_check
        _
      $region22: #{tpu_custom_call.1} parent=5 // pred_check_branch
        %107 = sbr.rel (%p104) target = $region24
      $region23: #{tpu_custom_call.1} parent=5 // pred_region
        %s108 = ssub.s32 %s13, 1
        %s109 = sand.u32 %s26, 1
        %s110 = scalar_lea.sflag [#allocation3], %s109
        %s111 = sand.u32 %s26, 1
        %s112 = smul.addr %s111, 8
        %s113 = scalar_lea.vmem [#allocation2], %s112
        // Predicated region
        $region25: #{tpu_custom_call.1} parent=23 // pred_check
          %p114 = pneg %p39
        $region26: #{tpu_custom_call.1} parent=23 // pred_check_branch
          %116 = sbr.rel (%p114) target = $region28
        $region27: #{tpu_custom_call.1} parent=23 // pred_region
          %117 = dma.done %s110, 128
        $region28: #{tpu_custom_call.1} parent=23 // pred_fallthru
          _
        %s118 = sand.u32 %s26, 1
        %s119 = scalar_lea.sflag [#allocation3], %s118
        %s120 = sand.u32 %s26, 1
        %s121 = smul.addr %s120, 8
        %s122 = scalar_lea.vmem [#allocation2], %s121
        %p123 = pneg %p39
        %p124 = pneg %p36
        %p125 = pneg %p65
        %p126 = pneg %p62
        %s127 = sand.u32 %s52, 1
        %s128 = scalar_lea.sflag [#allocation4], %s127
        %s129 = sand.u32 %s52, 1
        %s130 = scalar_lea.vmem [#allocation5], %s129
        %v131 = vld [vmem:[%s113] sm:$0xff]
        %vm132 = vcmask 261120
        %v133 = vsel %vm132, %v131, -inf
        %134 = vmax.xlane.f32.xlu0 %v133
        %v135 = vpop.xlane.xlu0 %134
        %v136 = vsub.f32 %v131, %v135
        %v137 = vmul.f32 %v136, 1.442695
        %v138 = vpow.pop %v137
        %v139 = vsel %vm132, %v138, 0.0
        %140 = vadd.xlane.f32.xlu0 %v139
        %v141 = vpop.xlane.xlu0 %140
        %v142 = vrcp.pop %v141
        %v143 = vmul.f32 1.0, %v142
        %v145 = vlaneseq
        %v146 = vand.u32 %v145, 127
        %v147 = vlaneseq
        %v148 = vshrl.u32 %v147, 7
        %v149 = vsub.s32 %v146, %v148
        %v150 = vrot.slane %v143, %v149
        %vm152 = vcmask 57344
        %153 = vst.msk [vmem:[%s130] sm:$0x1] %vm152, %v150
        %s154 = sand.u32 %s52, 1
        %s155 = scalar_lea.sflag [#allocation4], %s154
        %s156 = sand.u32 %s52, 1
        %s157 = scalar_lea.vmem [#allocation5], %s156
        // Predicated region
        $region29: #{tpu_custom_call.1} parent=23 // pred_check
          %p158 = pneg %p62
        $region30: #{tpu_custom_call.1} parent=23 // pred_check_branch
          %160 = sbr.rel (%p158) target = $region32
        $region31: #{tpu_custom_call.1} parent=23 // pred_region
          %s162 = ssub.s32 16, 16
          %163 = vsyncadd %s155, %s162
          %s164 = smul.addr %s18, 16
          %s165 = scalar_lea.hbm %s1, %s164
          %s167 = sshll.u32 %s157, 4
          %s168 = int_to_ptr.vmem [resolvable:$true] %s167
          %170 = dma.vmem_to_hbm [thread:$0]  %s168, 16, %s165, %s155
        $region32: #{tpu_custom_call.1} parent=23 // pred_fallthru
          _
      $region24: #{tpu_custom_call.1} parent=5 // pred_fallthru
        _
      %p171 = scmp.le.s32.totalorder 2, %s13
      // Predicated region
      $region33: #{tpu_custom_call.1} parent=5 // pred_check
        %p172 = pneg %p171
      $region34: #{tpu_custom_call.1} parent=5 // pred_check_branch
        %174 = sbr.rel (%p172) target = $region36
      $region35: #{tpu_custom_call.1} parent=5 // pred_region
        %s175 = ssub.s32 %s13, 2
        // Predicated region
        $region37: #{tpu_custom_call.1} parent=35 // pred_check
          %p176 = pneg %p68
        $region38: #{tpu_custom_call.1} parent=35 // pred_check_branch
          %178 = sbr.rel (%p176) target = $region40
        $region39: #{tpu_custom_call.1} parent=35 // pred_region
          %s179 = sand.u32 %s53, 1
          %s180 = scalar_lea.sflag [#allocation4], %s179
          %s181 = sand.u32 %s53, 1
          %s182 = scalar_lea.vmem [#allocation5], %s181
          %183 = dma.done %s180, 16
        $region40: #{tpu_custom_call.1} parent=35 // pred_fallthru
          _
      $region36: #{tpu_custom_call.1} parent=5 // pred_fallthru
        _
    $region6: #{tpu_custom_call.1} parent=1 // loop_footer
      %s17 = sadd.s32 1, %s13
    $region7: #{tpu_custom_call.1} parent=1 // loop_footer_branch
      %12 = sbr.rel target = $region3
    $region8: #{tpu_custom_call.1} parent=1 // loop_exit
      _
    %184 = vsyncpa [#allocation3], 1
    %s185 = scalar_lea.sflag [#allocation3], 1
    %186 = vsyncpa %s185, 1
    %187 = vsyncpa [#allocation4], 1
    %s188 = scalar_lea.sflag [#allocation4], 1
    %189 = vsyncpa %s188, 1

</llo_original>
